<compile_context>
chip_gen: v7x
topology: tpu7x:2x2x1
jax: 0.10.0
libtpu: 0.0.40
codegen_flags: <defaults>
</compile_context>

<pallas_src>
import functools
import math

import jax
import jax.numpy as jnp
from jax.experimental import pallas as pl
from jax.experimental.pallas import tpu as pltpu

NORM_EPS = 1e-5


# --------------------------------------------------------------------------- #
# small helpers
# --------------------------------------------------------------------------- #
def _tile(dim, target, quantum):
    """Largest divisor of `dim` that is a multiple of `quantum` and <= `target`;
    falls back to the full `dim` (a full-extent block is always legal)."""
    if dim <= target:
        return dim
    cand = (target // quantum) * quantum
    while cand >= quantum:
        if dim % cand == 0:
            return cand
        cand -= quantum
    return dim


def _cparams(vmem_limit_bytes, *semantics):
    return pltpu.CompilerParams(dimension_semantics=semantics,
                                vmem_limit_bytes=vmem_limit_bytes)


def apply_rope(xq, xk, cos, sin):
    """Interleaved-pair rotary embedding (mirrors torch view_as_complex path).
    xq/xk: (B, S, H*, hd);  cos/sin: (S, hd//2).  Computed in f32, cast back."""
    def rot(x):
        xf = x.astype(jnp.float32).reshape(*x.shape[:-1], x.shape[-1] // 2, 2)
        xr, xi = xf[..., 0], xf[..., 1]
        c = cos[None, :, None, :]
        s = sin[None, :, None, :]
        out = jnp.stack([xr * c - xi * s, xr * s + xi * c], axis=-1)
        return out.reshape(x.shape).astype(x.dtype)
    return rot(xq), rot(xk)


# --------------------------------------------------------------------------- #
# kernels
# --------------------------------------------------------------------------- #
def _norm_linear_kernel(x_ref, nw_ref, wt_ref, o_ref, *, eps):
    """o = rmsnorm(x) @ Wt     (norm in f32, matmul bf16 x bf16 -> f32)."""
    x = x_ref[...].astype(jnp.float32)                                  # (tm, D)
    ms = jnp.mean(x * x, axis=-1, keepdims=True)
    xn = ((x * jax.lax.rsqrt(ms + eps)) * nw_ref[...]).astype(wt_ref.dtype)
    o_ref[...] = jnp.dot(xn, wt_ref[...],
                         preferred_element_type=jnp.float32).astype(o_ref.dtype)


def _attention_kernel(q_ref, k_ref, v_ref, m_ref, o_ref, *, scale):
    """Per-batch GQA attention.  q: (G, REP*S, hd)  k/v: (G, L, hd)  m: (REP*S, L)."""
    q = q_ref[...]
    k = k_ref[...]
    v = v_ref[...]
    s = jnp.einsum("gqd,gkd->gqk", q, k, preferred_element_type=jnp.float32)
    s = s * scale + m_ref[...][None, :, :]
    s = s - jnp.max(s, axis=-1, keepdims=True)
    p = jnp.exp(s)
    p = p / jnp.sum(p, axis=-1, keepdims=True)
    o = jnp.einsum("gqk,gkd->gqd", p.astype(v.dtype), v,
                   preferred_element_type=jnp.float32)
    o_ref[...] = o.astype(o_ref.dtype)


def _linear_residual_kernel(a_ref, wt_ref, r_ref, o_ref):
    """o = r + a @ Wt   (residual added in f32)."""
    acc = jnp.dot(a_ref[...], wt_ref[...], preferred_element_type=jnp.float32)
    o_ref[...] = (r_ref[...].astype(jnp.float32) + acc).astype(o_ref.dtype)


def _ffn_kernel(h_ref, nw_ref, w13_ref, w2t_ref, o_ref, acc_ref, xn_ref, *, eps):
    """o = h + W2( silu(rmsnorm(h) @ W1) * (rmsnorm(h) @ W3) )
    grid = (M tiles ["parallel"], F tiles ["arbitrary" reduction]).
    acc_ref: f32 (tm, D) accumulator resident across the F axis.
    xn_ref : bf16 (tm, D) normalized activations, computed once at j == 0."""
    j = pl.program_id(1)

    @pl.when(j == 0)
    def _():
        acc_ref[...] = jnp.zeros_like(acc_ref)
        h = h_ref[...].astype(jnp.float32)
        ms = jnp.mean(h * h, axis=-1, keepdims=True)
        xn_ref[...] = ((h * jax.lax.rsqrt(ms + eps)) * nw_ref[...]).astype(xn_ref.dtype)

    xn = xn_ref[...]                                                    # (tm, D) bf16
    g = jnp.dot(xn, w13_ref[0], preferred_element_type=jnp.float32)     # (tm, tf)
    u = jnp.dot(xn, w13_ref[1], preferred_element_type=jnp.float32)     # (tm, tf)
    hg = ((g * jax.nn.sigmoid(g)) * u).astype(w2t_ref.dtype)            # silu(g)*u
    acc_ref[...] += jnp.dot(hg, w2t_ref[...], preferred_element_type=jnp.float32)

    @pl.when(j == pl.num_programs(1) - 1)
    def _():
        o_ref[...] = (h_ref[...].astype(jnp.float32) + acc_ref[...]).astype(o_ref.dtype)


# --------------------------------------------------------------------------- #
# parameter preparation (done ONCE at load time, not per forward call)
# --------------------------------------------------------------------------- #
def prepare_params(wq, wk, wv, wo, w1, w2, w3, attn_norm_w, ffn_norm_w,
                   *, n_heads, n_kv_heads):
    """Transpose PyTorch-layout [out, in] weights to [in, out], pack, cast to bf16."""
    bf = jnp.bfloat16
    head_dim = wq.shape[0] // n_heads
    return dict(
        wqkv_t=jnp.concatenate([wq.T, wk.T, wv.T], axis=1).astype(bf),  # (D, (H+2KVH)*hd)
        wo_t=wo.T.astype(bf),                                           # (H*hd, D)
        w13=jnp.stack([w1.T, w3.T], axis=0).astype(bf),                 # (2, D, F)
        w2t=w2.T.astype(bf),                                            # (F, D)
        attn_norm_w=attn_norm_w.reshape(1, -1).astype(jnp.float32),
        ffn_norm_w=ffn_norm_w.reshape(1, -1).astype(jnp.float32),
        n_heads=n_heads, n_kv_heads=n_kv_heads, head_dim=head_dim,
    )


# --------------------------------------------------------------------------- #
# full TransformerBlock forward
# --------------------------------------------------------------------------- #
def transformer_block(x, start_pos, rope_cos, rope_sin, mask, params,
                      cache_k, cache_v, *, eps=NORM_EPS,
                      tm=256, tf=256, proj_tn=512,
                      vmem_limit_bytes=48 * 1024 * 1024):
    B, S, D = x.shape
    H, KVH, hd = params["n_heads"], params["n_kv_heads"], params["head_dim"]
    REP = H // KVH
    M = B * S
    L = start_pos + S                      # kv length attended (python int)
    assert M % 8 == 0, "token count B*S must be a multiple of 8 — pad batch/sequence"

    bf = jnp.bfloat16
    x2d = x.astype(bf).reshape(M, D)
    tm_ = _tile(M, tm, 8)                  # capped row tile; >=2 tiles at prefill sizes

    # ---- 1) attention_norm fused into the QKV projection --------------------
    wqkv_t = params["wqkv_t"]
    Nq = wqkv_t.shape[1]
    tn_q = _tile(Nq, proj_tn, 128)
    qkv = pl.pallas_call(
        functools.partial(_norm_linear_kernel, eps=eps),
        out_shape=jax.ShapeDtypeStruct((M, Nq), bf),
        grid_spec=pltpu.PrefetchScalarGridSpec(
            num_scalar_prefetch=0,
            grid=(M // tm_, Nq // tn_q),
            in_specs=[
                pl.BlockSpec((tm_, D), lambda i, j: (i, 0)),
                pl.BlockSpec((1, D), lambda i, j: (0, 0)),
                pl.BlockSpec((D, tn_q), lambda i, j: (0, j)),
            ],
            out_specs=pl.BlockSpec((tm_, tn_q), lambda i, j: (i, j)),
        ),
        compiler_params=_cparams(vmem_limit_bytes, "parallel", "parallel"),
    )(x2d, params["attn_norm_w"], wqkv_t)

    dq, dkv = H * hd, KVH * hd
    q = qkv[:, :dq].reshape(B, S, H, hd)
    k = qkv[:, dq:dq + dkv].reshape(B, S, KVH, hd)
    v = qkv[:, dq + dkv:].reshape(B, S, KVH, hd)

    # TODO(synk): RoPE, the KV-cache scatter and the head reshapes are plain-JAX
    # glue between kernels; they could be fused into the QKV kernel later.
    q, k = apply_rope(q, k, rope_cos, rope_sin)
    cache_k = jax.lax.dynamic_update_slice(cache_k, k.astype(cache_k.dtype),
                                           (0, start_pos, 0, 0))
    cache_v = jax.lax.dynamic_update_slice(cache_v, v.astype(cache_v.dtype),
                                           (0, start_pos, 0, 0))
    keys = cache_k[:B, :L]                 # (B, L, KVH, hd)
    vals = cache_v[:B, :L]

    # GQA: fold the REP query heads sharing a kv head into the q-row axis
    # (equivalent to repeat_kv without materializing repeated K/V).
    qg = q.transpose(0, 2, 1, 3).reshape(B, KVH, REP * S, hd).astype(bf)
    kg = keys.transpose(0, 2, 1, 3).astype(bf)                  # (B, KVH, L, hd)
    vg = vals.transpose(0, 2, 1, 3).astype(bf)
    mask_g = jnp.tile(mask.astype(jnp.float32), (REP, 1))       # (REP*S, L)

    # ---- 2) attention core ----------------------------------------------------
    attn = pl.pallas_call(
        functools.partial(_attention_kernel, scale=1.0 / math.sqrt(hd)),
        out_shape=jax.ShapeDtypeStruct((B, KVH, REP * S, hd), bf),
        grid_spec=pltpu.PrefetchScalarGridSpec(
            num_scalar_prefetch=0,
            grid=(B,),
            in_specs=[
                pl.BlockSpec((None, KVH, REP * S, hd), lambda b: (b, 0, 0, 0)),
                pl.BlockSpec((None, KVH, L, hd), lambda b: (b, 0, 0, 0)),
                pl.BlockSpec((None, KVH, L, hd), lambda b: (b, 0, 0, 0)),
                pl.BlockSpec((REP * S, L), lambda b: (0, 0)),
            ],
            out_specs=pl.BlockSpec((None, KVH, REP * S, hd), lambda b: (b, 0, 0, 0)),
        ),
        compiler_params=_cparams(vmem_limit_bytes, "parallel"),
    )(qg, kg, vg, mask_g)

    attn2d = attn.reshape(B, KVH, REP, S, hd).transpose(0, 3, 1, 2, 4) \
                 .reshape(M, H * hd)

    # ---- 3) output projection fused with first residual ----------------------
    wo_t = params["wo_t"]
    tn_o = _tile(D, proj_tn, 128)
    h2d = pl.pallas_call(
        _linear_residual_kernel,
        out_shape=jax.ShapeDtypeStruct((M, D), bf),
        grid_spec=pltpu.PrefetchScalarGridSpec(
            num_scalar_prefetch=0,
            grid=(M // tm_, D // tn_o),
            in_specs=[
                pl.BlockSpec((tm_, H * hd), lambda i, j: (i, 0)),
                pl.BlockSpec((H * hd, tn_o), lambda i, j: (0, j)),
                pl.BlockSpec((tm_, tn_o), lambda i, j: (i, j)),
            ],
            out_specs=pl.BlockSpec((tm_, tn_o), lambda i, j: (i, j)),
        ),
        compiler_params=_cparams(vmem_limit_bytes, "parallel", "parallel"),
    )(attn2d, wo_t, x2d)

    # ---- 4) ffn_norm + SwiGLU FFN fused with second residual -----------------
    w13, w2t = params["w13"], params["w2t"]
    F_ = w2t.shape[0]
    tf_ = _tile(F_, tf, 128)
    out2d = pl.pallas_call(
        functools.partial(_ffn_kernel, eps=eps),
        out_shape=jax.ShapeDtypeStruct((M, D), bf),
        grid_spec=pltpu.PrefetchScalarGridSpec(
            num_scalar_prefetch=0,
            grid=(M // tm_, F_ // tf_),
            in_specs=[
                pl.BlockSpec((tm_, D), lambda i, j: (i, 0)),          # h (norm in + residual)
                pl.BlockSpec((1, D), lambda i, j: (0, 0)),            # ffn_norm weight
                pl.BlockSpec((2, D, tf_), lambda i, j: (0, 0, j)),    # stacked W1^T/W3^T
                pl.BlockSpec((tf_, D), lambda i, j: (j, 0)),          # W2^T
            ],
            out_specs=pl.BlockSpec((tm_, D), lambda i, j: (i, 0)),
            scratch_shapes=[pltpu.VMEM((tm_, D), jnp.float32),        # acc
                            pltpu.VMEM((tm_, D), bf)],                # cached rmsnorm(h)
        ),
        compiler_params=_cparams(vmem_limit_bytes, "parallel", "arbitrary"),
    )(h2d, params["ffn_norm_w"], w13, w2t)

    out = out2d.reshape(B, S, D).astype(x.dtype)
    return out, cache_k, cache_v


# --------------------------------------------------------------------------- #
# pure-JAX reference mirroring the kernel dtype path (bf16 matmuls, f32 accum)
# --------------------------------------------------------------------------- #
def reference_block(x, start_pos, cos, sin, mask, raw, cache_k, cache_v,
                    *, n_heads, n_kv_heads, eps=NORM_EPS):
    B, S, D = x.shape
    hd = raw["wq"].shape[0] // n_heads
    rep = n_heads // n_kv_heads
    bf = jnp.bfloat16
    xb = x.astype(bf)

    def rms(v, w):
        vf = v.astype(jnp.float32)
        return ((vf * jax.lax.rsqrt(jnp.mean(vf * vf, -1, keepdims=True) + eps)) * w
                ).astype(bf)

    def lin(a, w):  # torch layout (out, in)
        return jnp.dot(a, w.T.astype(bf), preferred_element_type=jnp.float32).astype(bf)

    xn = rms(xb, raw["attn_norm_w"])
    q = lin(xn, raw["wq"]).reshape(B, S, n_heads, hd)
    k = lin(xn, raw["wk"]).reshape(B, S, n_kv_heads, hd)
    v = lin(xn, raw["wv"]).reshape(B, S, n_kv_heads, hd)
    q, k = apply_rope(q, k, cos, sin)
    ck = jax.lax.dynamic_update_slice(cache_k, k.astype(cache_k.dtype),
                                      (0, start_pos, 0, 0))
    cv = jax.lax.dynamic_update_slice(cache_v, v.astype(cache_v.dtype),
                                      (0, start_pos, 0, 0))
    keys = jnp.repeat(ck[:B, :start_pos + S], rep, axis=2).transpose(0, 2, 1, 3)
    vals = jnp.repeat(cv[:B, :start_pos + S], rep, axis=2).transpose(0, 2, 1, 3)
    qh = q.transpose(0, 2, 1, 3).astype(bf)
    sc = jnp.einsum("bhqd,bhkd->bhqk", qh, keys.astype(bf),
                    preferred_element_type=jnp.float32) / math.sqrt(hd)
    sc = sc + mask.astype(jnp.float32)[None, None]
    sc = sc - jnp.max(sc, axis=-1, keepdims=True)
    p = jnp.exp(sc)
    p = p / jnp.sum(p, axis=-1, keepdims=True)
    o = jnp.einsum("bhqk,bhkd->bhqd", p.astype(bf), vals.astype(bf),
                   preferred_element_type=jnp.float32).astype(bf)
    o = o.transpose(0, 2, 1, 3).reshape(B * S, n_heads * hd)
    x2d = xb.reshape(B * S, D)
    h = (x2d.astype(jnp.float32) +
         jnp.dot(o, raw["wo"].T.astype(bf), preferred_element_type=jnp.float32)).astype(bf)
    hn = rms(h, raw["ffn_norm_w"])
    g = jnp.dot(hn, raw["w1"].T.astype(bf), preferred_element_type=jnp.float32)
    u = jnp.dot(hn, raw["w3"].T.astype(bf), preferred_element_type=jnp.float32)
    hg = ((g * jax.nn.sigmoid(g)) * u).astype(bf)
    out = (h.astype(jnp.float32) +
           jnp.dot(hg, raw["w2"].T.astype(bf), preferred_element_type=jnp.float32)).astype(bf)
    return out.reshape(B, S, D).astype(x.dtype)


# --------------------------------------------------------------------------- #
# demo at small stand-in shapes (DIM=4096 -> 256, FFN_DIM=14336 -> 512, ...)
# --------------------------------------------------------------------------- #
if __name__ == "__main__":
    B, S = 2, 8
    D = 256                   # stand-in for DIM=4096
    N_HEADS = 8               # stand-in for 32
    N_KV_HEADS = 2            # stand-in for 8
    HEAD_DIM = D // N_HEADS   # 32 (stand-in for 128)
    FFN = 512                 # stand-in for 14336
    MAX_BS, MAX_SEQ = 4, 16
    start_pos = 0

    key = jax.random.PRNGKey(0)
    ks = jax.random.split(key, 10)
    x = jax.random.normal(ks[0], (B, S, D), dtype=jnp.float32)
    raw = dict(
        wq=jax.random.normal(ks[1], (N_HEADS * HEAD_DIM, D), jnp.float32) / D ** 0.5,
        wk=jax.random.normal(ks[2], (N_KV_HEADS * HEAD_DIM, D), jnp.float32) / D ** 0.5,
        wv=jax.random.normal(ks[3], (N_KV_HEADS * HEAD_DIM, D), jnp.float32) / D ** 0.5,
        wo=jax.random.normal(ks[4], (D, N_HEADS * HEAD_DIM), jnp.float32) / D ** 0.5,
        w1=jax.random.normal(ks[5], (FFN, D), jnp.float32) / D ** 0.5,
        w3=jax.random.normal(ks[6], (FFN, D), jnp.float32) / D ** 0.5,
        w2=jax.random.normal(ks[7], (D, FFN), jnp.float32) / FFN ** 0.5,
        attn_norm_w=1.0 + 0.1 * jax.random.normal(ks[8], (D,), jnp.float32),
        ffn_norm_w=1.0 + 0.1 * jax.random.normal(ks[9], (D,), jnp.float32),
    )
    params = prepare_params(raw["wq"], raw["wk"], raw["wv"], raw["wo"],
                            raw["w1"], raw["w2"], raw["w3"],
                            raw["attn_norm_w"], raw["ffn_norm_w"],
                            n_heads=N_HEADS, n_kv_heads=N_KV_HEADS)

    # RoPE tables (positions start_pos .. start_pos+S-1)
    inv_freq = 1.0 / (500000.0 ** (jnp.arange(0, HEAD_DIM, 2, dtype=jnp.float32) / HEAD_DIM))
    t = jnp.arange(start_pos, start_pos + S, dtype=jnp.float32)
    freqs = jnp.outer(t, inv_freq)                       # (S, hd/2)
    rope_cos, rope_sin = jnp.cos(freqs), jnp.sin(freqs)

    # causal mask (S, start_pos+S): 0 where allowed, large-negative where masked
    L = start_pos + S
    rows = jnp.arange(S)[:, None] + start_pos
    cols = jnp.arange(L)[None, :]
    mask = jnp.where(cols <= rows, 0.0, -1e30).astype(jnp.float32)

    cache_k = jnp.zeros((MAX_BS, MAX_SEQ, N_KV_HEADS, HEAD_DIM), jnp.bfloat16)
    cache_v = jnp.zeros((MAX_BS, MAX_SEQ, N_KV_HEADS, HEAD_DIM), jnp.bfloat16)

    out, new_ck, new_cv = transformer_block(
        x, start_pos, rope_cos, rope_sin, mask, params, cache_k, cache_v)
    jax.block_until_ready(out)

    ref = reference_block(x, start_pos, rope_cos, rope_sin, mask, raw,
                          cache_k, cache_v, n_heads=N_HEADS, n_kv_heads=N_KV_HEADS)
    err = float(jnp.max(jnp.abs(out.astype(jnp.float32) - ref.astype(jnp.float32))))
    assert jnp.allclose(out.astype(jnp.float32), ref.astype(jnp.float32),
                        atol=7e-2, rtol=7e-2), f"mismatch vs reference, max|diff|={err}"

    print("KERNEL_OK")
</pallas_src>

<mosaic_0001>
module attributes {stable_mosaic.version = 11 : i64} {
  func.func @_norm_linear_kernel(%arg0: i32, %arg1: i32, %arg2: memref<16x256xbf16, #tpu.memory_space<vmem>>, %arg3: memref<1x256xf32, #tpu.memory_space<vmem>>, %arg4: memref<256x384xbf16, #tpu.memory_space<vmem>>, %arg5: memref<16x384xbf16, #tpu.memory_space<vmem>>) attributes {dimension_semantics = [#tpu.dimension_semantics<parallel>, #tpu.dimension_semantics<parallel>], iteration_bounds = array<i64: 1, 1>, scalar_prefetch = 0 : i64, scratch_operands = 0 : i64, tpu.core_type = #tpu.core_type<tc>, window_params = [{transform_indices = @transform_0, window_bounds = array<i64: 16, 256>}, {pipeline_mode = #tpu.pipeline_mode<synchronous>, transform_indices = @transform_1, window_bounds = array<i64: 1, 256>}, {transform_indices = @transform_2, window_bounds = array<i64: 256, 384>}, {transform_indices = @transform_3, window_bounds = array<i64: 16, 384>}]} {
    %c0 = arith.constant 0 : index
    %c0_0 = arith.constant 0 : index
    %0 = vector.load %arg2[%c0, %c0_0] : memref<16x256xbf16, #tpu.memory_space<vmem>>, vector<16x256xbf16>
    %1 = arith.extf %0 : vector<16x256xbf16> to vector<16x256xf32>
    %2 = arith.mulf %1, %1 : vector<16x256xf32>
    %cst = arith.constant dense<0.000000e+00> : vector<16xf32>
    %3 = vector.multi_reduction <add>, %2, %cst [1] : vector<16x256xf32> to vector<16xf32>
    %4 = vector.shape_cast %3 : vector<16xf32> to vector<16x1xf32>
    %cst_1 = arith.constant 2.560000e+02 : f32
    %5 = vector.broadcast %cst_1 : f32 to vector<16x1xf32>
    %6 = arith.divf %4, %5 : vector<16x1xf32>
    %cst_2 = arith.constant 9.99999974E-6 : f32
    %7 = vector.broadcast %cst_2 : f32 to vector<16x1xf32>
    %8 = arith.addf %6, %7 : vector<16x1xf32>
    %9 = math.rsqrt %8 : vector<16x1xf32>
    %10 = vector.broadcast %9 : vector<16x1xf32> to vector<16x256xf32>
    %11 = arith.mulf %1, %10 : vector<16x256xf32>
    %c0_3 = arith.constant 0 : index
    %c0_4 = arith.constant 0 : index
    %12 = vector.load %arg3[%c0_3, %c0_4] : memref<1x256xf32, #tpu.memory_space<vmem>>, vector<1x256xf32>
    %13 = vector.broadcast %12 : vector<1x256xf32> to vector<16x256xf32>
    %14 = arith.mulf %11, %13 : vector<16x256xf32>
    %15 = arith.truncf %14 : vector<16x256xf32> to vector<16x256xbf16>
    %c0_5 = arith.constant 0 : index
    %c0_6 = arith.constant 0 : index
    %16 = vector.load %arg4[%c0_5, %c0_6] : memref<256x384xbf16, #tpu.memory_space<vmem>>, vector<256x384xbf16>
    %cst_7 = arith.constant dense<0.000000e+00> : vector<16x384xf32>
    %17 = tpu.matmul %15, %16, %cst_7 {dimension_numbers = #tpu.dot_dimension_numbers<[1], [0], [0], [1], [0, 0, 1, 1], [], []>} : vector<16x256xbf16>, vector<256x384xbf16>, vector<16x384xf32> -> vector<16x384xf32>
    %18 = arith.truncf %17 : vector<16x384xf32> to vector<16x384xbf16>
    %c0_8 = arith.constant 0 : index
    %c0_9 = arith.constant 0 : index
    %19 = vector.load %arg5[%c0_8, %c0_9] : memref<16x384xbf16, #tpu.memory_space<vmem>>, vector<16x384xbf16>
    tpu.vector_store %arg5[%c0_8, %c0_9], %18 {strides = array<i32>} : memref<16x384xbf16, #tpu.memory_space<vmem>>, vector<16x384xbf16>,
    return
  }
  func.func @transform_0(%arg0: i32, %arg1: i32) -> (i32, i32) {
    %c0_i32 = arith.constant 0 : i32
    %c0_i32_0 = arith.constant 0 : i32
    return %arg0, %c0_i32 : i32, i32
  }
  func.func @transform_1(%arg0: i32, %arg1: i32) -> (i32, i32) {
    %c0_i32 = arith.constant 0 : i32
    %c0_i32_0 = arith.constant 0 : i32
    %c0_i32_1 = arith.constant 0 : i32
    return %c0_i32, %c0_i32_0 : i32, i32
  }
  func.func @transform_2(%arg0: i32, %arg1: i32) -> (i32, i32) {
    %c0_i32 = arith.constant 0 : i32
    %c0_i32_0 = arith.constant 0 : i32
    return %c0_i32, %arg1 : i32, i32
  }
  func.func @transform_3(%arg0: i32, %arg1: i32) -> (i32, i32) {
    %c0_i32 = arith.constant 0 : i32
    return %arg0, %arg1 : i32, i32
  }
}

</mosaic_0001>

<llo_original>
// kernel: tpu_custom_call.1
$region0: #{tpu_custom_call.1}
  #allocation0 [shape = 'u32[]', space=smem, size = 0x4, offset = 0x4, fixed_abs, tag = 'smem constant byte address 0x4 - core index']
  #allocation1 [shape = 'u32[144,128]{1,0:T(1,128)}', space=vmem, size = 0x12000, scoped, tag = 'internal scratch']
  %s0 = inlined_call_operand.hbm [shape: bf16[16,256], index: 0, kind: input, shape index: {}]
  %s1 = inlined_call_operand.vmem [shape: f32[1,256], index: 1, kind: input, shape index: {}]
  %s2 = inlined_call_operand.hbm [shape: bf16[256,384], index: 2, kind: input, shape index: {}]
  %s3 = inlined_call_operand.hbm [shape: bf16[16,384], index: 3, kind: output, shape index: {}]
  %s4 = sld [smem:[#allocation0]]
  $region30: #{tpu_custom_call.1} parent=0
    _
  %s6 = ssub.s32 1, %s4
  %s7 = scalar_select 0, %s6, %s4
  $region1: #{tpu_custom_call.1} parent=0
    #allocation2 [shape = 'u8[8192]{0}', space=vmem, size = 0x2000, scoped, tag = 'input window, operand 0, single buffered']
    #allocation3 [shape = 's32[1]{0}', space=sflag, size = 0x4, scoped, tag = 'scoped memory for tpu_custom_call.1']
    #allocation4 [shape = 's32[1]{0}', space=sflag, size = 0x4, scoped, tag = 'scoped memory for tpu_custom_call.1']
    #allocation5 [shape = 'u8[196608]{0}', space=vmem, size = 0x30000, scoped, tag = 'input window, operand 2, single buffered']
    #allocation6 [shape = 's32[1]{0}', space=sflag, size = 0x4, scoped, tag = 'scoped memory for tpu_custom_call.1']
    #allocation7 [shape = 'u8[12288]{0}', space=vmem, size = 0x3000, scoped, tag = 'output window, operand 0, single buffered']
    %8 = vsyncpa [#allocation3], 0
    %9 = vsyncpa [#allocation6], 0
    %10 = vsyncpa [#allocation4], 0
    // Predicated region
    $region2: #{tpu_custom_call.1} parent=1 // pred_check
      _
    $region3: #{tpu_custom_call.1} parent=1 // pred_check_branch
      %12 = sbr.rel (0) target = $region5
    $region4: #{tpu_custom_call.1} parent=1 // pred_region
      %s14 = ssub.s32 256, 256
      %15 = vsyncadd [#allocation3], %s14
      %s16 = sshll.u32 [#allocation2], 4
      %s17 = int_to_ptr.vmem [resolvable:$true] %s16
      %22 = dma.hbm_to_vmem [thread:$0]  %s0, 256, %s17, [#allocation3], 128, 128, 8
    $region5: #{tpu_custom_call.1} parent=1 // pred_fallthru
      _
    // Predicated region
    $region6: #{tpu_custom_call.1} parent=1 // pred_check
      _
    $region7: #{tpu_custom_call.1} parent=1 // pred_check_branch
      %24 = sbr.rel (0) target = $region9
    $region8: #{tpu_custom_call.1} parent=1 // pred_region
      _
    $region9: #{tpu_custom_call.1} parent=1 // pred_fallthru
      _
    // Predicated region
    $region10: #{tpu_custom_call.1} parent=1 // pred_check
      _
    $region11: #{tpu_custom_call.1} parent=1 // pred_check_branch
      %26 = sbr.rel (0) target = $region13
    $region12: #{tpu_custom_call.1} parent=1 // pred_region
      %s28 = ssub.s32 6144, 6144
      %29 = vsyncadd [#allocation6], %s28
      %s30 = sshll.u32 [#allocation5], 4
      %s31 = int_to_ptr.vmem [resolvable:$true] %s30
      %36 = dma.hbm_to_vmem [thread:$0]  %s2, 6144, %s31, [#allocation6], 192, 192, 12
    $region13: #{tpu_custom_call.1} parent=1 // pred_fallthru
      _
    // Predicated region
    $region14: #{tpu_custom_call.1} parent=1 // pred_check
      _
    $region15: #{tpu_custom_call.1} parent=1 // pred_check_branch
      %38 = sbr.rel (0) target = $region17
    $region16: #{tpu_custom_call.1} parent=1 // pred_region
      %39 = dma.done [#allocation3], 256
    $region17: #{tpu_custom_call.1} parent=1 // pred_fallthru
      _
    // Predicated region
    $region18: #{tpu_custom_call.1} parent=1 // pred_check
      _
    $region19: #{tpu_custom_call.1} parent=1 // pred_check_branch
      %41 = sbr.rel (0) target = $region21
    $region20: #{tpu_custom_call.1} parent=1 // pred_region
      %42 = dma.done [#allocation6], 6144
    $region21: #{tpu_custom_call.1} parent=1 // pred_fallthru
      _
    %v44 = vld [vmem:[#allocation2] sm:$0xff]
    %v45 = vld [vmem:[#allocation2 + $0x8] sm:$0xff]
    %v46 = vunpack.c.l.bf16 %v44
    %v47 = vunpack.c.h.bf16 %v44
    %v48 = vunpack.c.l.bf16 %v45
    %v49 = vunpack.c.h.bf16 %v45
    %v50 = vmul.f32 %v46, %v46
    %v51 = vmul.f32 %v47, %v47
    %v52 = vmul.f32 %v48, %v48
    %v53 = vmul.f32 %v49, %v49
    %v54 = vadd.f32 %v50, %v51
    %55 = vadd.xlane.f32.xlu0 %v54
    %v56 = vpop.xlane.xlu0 %55
    %v57 = vadd.f32 %v52, %v53
    %58 = vadd.xlane.f32.xlu0 %v57
    %v59 = vpop.xlane.xlu0 %58
    %v60 = vrcp.pop 256.0
    %v61 = vmul.f32 %v56, %v60
    %v62 = vmul.f32 %v59, %v60
    %v63 = vadd.f32 %v61, 1e-05
    %v64 = vadd.f32 %v62, 1e-05
    %v65 = vrsqrt.pop %v63
    %v66 = vrsqrt.pop %v64
    %v67 = vmul.f32 %v46, %v65
    %v68 = vmul.f32 %v47, %v65
    %v69 = vmul.f32 %v48, %v66
    %v70 = vmul.f32 %v49, %v66
    %v71 = vld [vmem:[%s1] sm:$0x3]
    %v73 = vlaneseq
    %v74 = vshrl.u32 %v73, 7
    %v75 = vsub.s32 0, %v74
    %v76 = vrot.slane %v71, %v75
    %v77 = vlaneseq
    %v78 = vshrl.u32 %v77, 7
    %v79 = vsub.s32 1, %v78
    %v80 = vrot.slane %v71, %v79
    %v83 = vmul.f32 %v67, %v76
    %v84 = vmul.f32 %v68, %v80
    %v85 = vmul.f32 %v69, %v76
    %v86 = vmul.f32 %v70, %v80
    %v87 = vpack.c.bf16 %v85, %v83
    %v88 = vpack.c.bf16 %v86, %v84
    %v89 = vld [vmem:[#allocation5] sm:$0xff]
    %v90 = vld [vmem:[#allocation5 + $0x8] sm:$0xf]
    %v91 = vld [vmem:[#allocation5 + $0xc] sm:$0xff]
    %v92 = vld [vmem:[#allocation5 + $0x14] sm:$0xf]
    %v93 = vld [vmem:[#allocation5 + $0x18] sm:$0xff]
    %v94 = vld [vmem:[#allocation5 + $0x20] sm:$0xf]
    %v95 = vld [vmem:[#allocation5 + $0x24] sm:$0xff]
    %v96 = vld [vmem:[#allocation5 + $0x2c] sm:$0xf]
    %v97 = vld [vmem:[#allocation5 + $0x30] sm:$0xff]
    %v98 = vld [vmem:[#allocation5 + $0x38] sm:$0xf]
    %v99 = vld [vmem:[#allocation5 + $0x3c] sm:$0xff]
    %v100 = vld [vmem:[#allocation5 + $0x44] sm:$0xf]
    %v101 = vld [vmem:[#allocation5 + $0x48] sm:$0xff]
    %v102 = vld [vmem:[#allocation5 + $0x50] sm:$0xf]
    %v103 = vld [vmem:[#allocation5 + $0x54] sm:$0xff]
    %v104 = vld [vmem:[#allocation5 + $0x5c] sm:$0xf]
    %v105 = vld [vmem:[#allocation5 + $0x60] sm:$0xff]
    %v106 = vld [vmem:[#allocation5 + $0x68] sm:$0xf]
    %v107 = vld [vmem:[#allocation5 + $0x6c] sm:$0xff]
    %v108 = vld [vmem:[#allocation5 + $0x74] sm:$0xf]
    %v109 = vld [vmem:[#allocation5 + $0x78] sm:$0xff]
    %v110 = vld [vmem:[#allocation5 + $0x80] sm:$0xf]
    %v111 = vld [vmem:[#allocation5 + $0x84] sm:$0xff]
    %v112 = vld [vmem:[#allocation5 + $0x8c] sm:$0xf]
    %v113 = vld [vmem:[#allocation5 + $0x90] sm:$0xff]
    %v114 = vld [vmem:[#allocation5 + $0x98] sm:$0xf]
    %v115 = vld [vmem:[#allocation5 + $0x9c] sm:$0xff]
    %v116 = vld [vmem:[#allocation5 + $0xa4] sm:$0xf]
    %v117 = vld [vmem:[#allocation5 + $0xa8] sm:$0xff]
    %v118 = vld [vmem:[#allocation5 + $0xb0] sm:$0xf]
    %v119 = vld [vmem:[#allocation5 + $0xb4] sm:$0xff]
    %v120 = vld [vmem:[#allocation5 + $0xbc] sm:$0xf]
    %v121 = vld [vmem:[#allocation5 + $0xc0] sm:$0xff]
    %v122 = vld [vmem:[#allocation5 + $0xc8] sm:$0xf]
    %v123 = vld [vmem:[#allocation5 + $0xcc] sm:$0xff]
    %v124 = vld [vmem:[#allocation5 + $0xd4] sm:$0xf]
    %v125 = vld [vmem:[#allocation5 + $0xd8] sm:$0xff]
    %v126 = vld [vmem:[#allocation5 + $0xe0] sm:$0xf]
    %v127 = vld [vmem:[#allocation5 + $0xe4] sm:$0xff]
    %v128 = vld [vmem:[#allocation5 + $0xec] sm:$0xf]
    %v129 = vld [vmem:[#allocation5 + $0xf0] sm:$0xff]
    %v130 = vld [vmem:[#allocation5 + $0xf8] sm:$0xf]
    %v131 = vld [vmem:[#allocation5 + $0xfc] sm:$0xff]
    %v132 = vld [vmem:[#allocation5 + $0x104] sm:$0xf]
    %v133 = vld [vmem:[#allocation5 + $0x108] sm:$0xff]
    %v134 = vld [vmem:[#allocation5 + $0x110] sm:$0xf]
    %v135 = vld [vmem:[#allocation5 + $0x114] sm:$0xff]
    %v136 = vld [vmem:[#allocation5 + $0x11c] sm:$0xf]
    %v137 = vld [vmem:[#allocation5 + $0x120] sm:$0xff]
    %v138 = vld [vmem:[#allocation5 + $0x128] sm:$0xf]
    %v139 = vld [vmem:[#allocation5 + $0x12c] sm:$0xff]
    %v140 = vld [vmem:[#allocation5 + $0x134] sm:$0xf]
    %v141 = vld [vmem:[#allocation5 + $0x138] sm:$0xff]
    %v142 = vld [vmem:[#allocation5 + $0x140] sm:$0xf]
    %v143 = vld [vmem:[#allocation5 + $0x144] sm:$0xff]
    %v144 = vld [vmem:[#allocation5 + $0x14c] sm:$0xf]
    %v145 = vld [vmem:[#allocation5 + $0x150] sm:$0xff]
    %v146 = vld [vmem:[#allocation5 + $0x158] sm:$0xf]
    %v147 = vld [vmem:[#allocation5 + $0x15c] sm:$0xff]
    %v148 = vld [vmem:[#allocation5 + $0x164] sm:$0xf]
    %v149 = vld [vmem:[#allocation5 + $0x168] sm:$0xff]
    %v150 = vld [vmem:[#allocation5 + $0x170] sm:$0xf]
    %v151 = vld [vmem:[#allocation5 + $0x174] sm:$0xff]
    %v152 = vld [vmem:[#allocation5 + $0x17c] sm:$0xf]
    %v217 = vunpack.c.l.b16 %v89
    %v218 = vunpack.c.h.b16 %v89
    %v219 = vunpack.c.l.b16 %v90
    %v220 = vunpack.c.l.b16 %v91
    %v221 = vunpack.c.h.b16 %v91
    %v222 = vunpack.c.l.b16 %v92
    %v223 = vunpack.c.l.b16 %v93
    %v224 = vunpack.c.h.b16 %v93
    %v225 = vunpack.c.l.b16 %v94
    %v226 = vunpack.c.l.b16 %v95
    %v227 = vunpack.c.h.b16 %v95
    %v228 = vunpack.c.l.b16 %v96
    %v229 = vunpack.c.l.b16 %v97
    %v230 = vunpack.c.h.b16 %v97
    %v231 = vunpack.c.l.b16 %v98
    %v232 = vunpack.c.l.b16 %v99
    %v233 = vunpack.c.h.b16 %v99
    %v234 = vunpack.c.l.b16 %v100
    %v235 = vunpack.c.l.b16 %v101
    %v236 = vunpack.c.h.b16 %v101
    %v237 = vunpack.c.l.b16 %v102
    %v238 = vunpack.c.l.b16 %v103
    %v239 = vunpack.c.h.b16 %v103
    %v240 = vunpack.c.l.b16 %v104
    %v241 = vunpack.c.l.b16 %v105
    %v242 = vunpack.c.h.b16 %v105
    %v243 = vunpack.c.l.b16 %v106
    %v244 = vunpack.c.l.b16 %v107
    %v245 = vunpack.c.h.b16 %v107
    %v246 = vunpack.c.l.b16 %v108
    %v247 = vunpack.c.l.b16 %v109
    %v248 = vunpack.c.h.b16 %v109
    %v249 = vunpack.c.l.b16 %v110
    %v250 = vunpack.c.l.b16 %v111
    %v251 = vunpack.c.h.b16 %v111
    %v252 = vunpack.c.l.b16 %v112
    %v253 = vunpack.c.l.b16 %v113
    %v254 = vunpack.c.h.b16 %v113
    %v255 = vunpack.c.l.b16 %v114
    %v256 = vunpack.c.l.b16 %v115
    %v257 = vunpack.c.h.b16 %v115
    %v258 = vunpack.c.l.b16 %v116
    %v259 = vunpack.c.l.b16 %v117
    %v260 = vunpack.c.h.b16 %v117
    %v261 = vunpack.c.l.b16 %v118
    %v262 = vunpack.c.l.b16 %v119
    %v263 = vunpack.c.h.b16 %v119
    %v264 = vunpack.c.l.b16 %v120
    %v265 = vunpack.c.l.b16 %v121
    %v266 = vunpack.c.h.b16 %v121
    %v267 = vunpack.c.l.b16 %v122
    %v268 = vunpack.c.l.b16 %v123
    %v269 = vunpack.c.h.b16 %v123
    %v270 = vunpack.c.l.b16 %v124
    %v271 = vunpack.c.l.b16 %v125
    %v272 = vunpack.c.h.b16 %v125
    %v273 = vunpack.c.l.b16 %v126
    %v274 = vunpack.c.l.b16 %v127
    %v275 = vunpack.c.h.b16 %v127
    %v276 = vunpack.c.l.b16 %v128
    %v277 = vunpack.c.l.b16 %v129
    %v278 = vunpack.c.h.b16 %v129
    %v279 = vunpack.c.l.b16 %v130
    %v280 = vunpack.c.l.b16 %v131
    %v281 = vunpack.c.h.b16 %v131
    %v282 = vunpack.c.l.b16 %v132
    %v283 = vunpack.c.l.b16 %v133
    %v284 = vunpack.c.h.b16 %v133
    %v285 = vunpack.c.l.b16 %v134
    %v286 = vunpack.c.l.b16 %v135
    %v287 = vunpack.c.h.b16 %v135
    %v288 = vunpack.c.l.b16 %v136
    %v289 = vunpack.c.l.b16 %v137
    %v290 = vunpack.c.h.b16 %v137
    %v291 = vunpack.c.l.b16 %v138
    %v292 = vunpack.c.l.b16 %v139
    %v293 = vunpack.c.h.b16 %v139
    %v294 = vunpack.c.l.b16 %v140
    %v295 = vunpack.c.l.b16 %v141
    %v296 = vunpack.c.h.b16 %v141
    %v297 = vunpack.c.l.b16 %v142
    %v298 = vunpack.c.l.b16 %v143
    %v299 = vunpack.c.h.b16 %v143
    %v300 = vunpack.c.l.b16 %v144
    %v301 = vunpack.c.l.b16 %v145
    %v302 = vunpack.c.h.b16 %v145
    %v303 = vunpack.c.l.b16 %v146
    %v304 = vunpack.c.l.b16 %v147
    %v305 = vunpack.c.h.b16 %v147
    %v306 = vunpack.c.l.b16 %v148
    %v307 = vunpack.c.l.b16 %v149
    %v308 = vunpack.c.h.b16 %v149
    %v309 = vunpack.c.l.b16 %v150
    %v310 = vunpack.c.l.b16 %v151
    %v311 = vunpack.c.h.b16 %v151
    %v312 = vunpack.c.l.b16 %v152
    %v313 = vpack.c.b16 %v220, %v217
    %v314 = vpack.c.b16 %v221, %v218
    %v315 = vpack.c.b16 %v222, %v219
    %v316 = vpack.c.b16 %v226, %v223
    %v317 = vpack.c.b16 %v227, %v224
    %v318 = vpack.c.b16 %v228, %v225
    %v319 = vpack.c.b16 %v232, %v229
    %v320 = vpack.c.b16 %v233, %v230
    %v321 = vpack.c.b16 %v234, %v231
    %v322 = vpack.c.b16 %v238, %v235
    %v323 = vpack.c.b16 %v239, %v236
    %v324 = vpack.c.b16 %v240, %v237
    %v325 = vpack.c.b16 %v244, %v241
    %v326 = vpack.c.b16 %v245, %v242
    %v327 = vpack.c.b16 %v246, %v243
    %v328 = vpack.c.b16 %v250, %v247
    %v329 = vpack.c.b16 %v251, %v248
    %v330 = vpack.c.b16 %v252, %v249
    %v331 = vpack.c.b16 %v256, %v253
    %v332 = vpack.c.b16 %v257, %v254
    %v333 = vpack.c.b16 %v258, %v255
    %v334 = vpack.c.b16 %v262, %v259
    %v335 = vpack.c.b16 %v263, %v260
    %v336 = vpack.c.b16 %v264, %v261
    %v337 = vpack.c.b16 %v268, %v265
    %v338 = vpack.c.b16 %v269, %v266
    %v339 = vpack.c.b16 %v270, %v267
    %v340 = vpack.c.b16 %v274, %v271
    %v341 = vpack.c.b16 %v275, %v272
    %v342 = vpack.c.b16 %v276, %v273
    %v343 = vpack.c.b16 %v280, %v277
    %v344 = vpack.c.b16 %v281, %v278
    %v345 = vpack.c.b16 %v282, %v279
    %v346 = vpack.c.b16 %v286, %v283
    %v347 = vpack.c.b16 %v287, %v284
    %v348 = vpack.c.b16 %v288, %v285
    %v349 = vpack.c.b16 %v292, %v289
    %v350 = vpack.c.b16 %v293, %v290
    %v351 = vpack.c.b16 %v294, %v291
    %v352 = vpack.c.b16 %v298, %v295
    %v353 = vpack.c.b16 %v299, %v296
    %v354 = vpack.c.b16 %v300, %v297
    %v355 = vpack.c.b16 %v304, %v301
    %v356 = vpack.c.b16 %v305, %v302
    %v357 = vpack.c.b16 %v306, %v303
    %v358 = vpack.c.b16 %v310, %v307
    %v359 = vpack.c.b16 %v311, %v308
    %v360 = vpack.c.b16 %v312, %v309
    %409 = vmatprep.subr.bf16.mxu0 %v314
    %410 = vmatpush1.bf16.msra.mxu0 %v313
    %411 = vmatprep.subr.bf16.mxu0 %v317
    %412 = vmatpush1.bf16.msra.mxu0 %v316
    %413 = vmatprep.subr.bf16.mxu0 %v320
    %414 = vmatpush1.bf16.msra.mxu0 %v319
    %415 = vmatprep.subr.bf16.mxu0 %v323
    %416 = vmatpush1.bf16.msra.mxu0 %v322
    %417 = vmatprep.subr.bf16.mxu0 %v326
    %418 = vmatpush1.bf16.msra.mxu0 %v325
    %419 = vmatprep.subr.bf16.mxu0 %v329
    %420 = vmatpush1.bf16.msra.mxu0 %v328
    %421 = vmatprep.subr.bf16.mxu0 %v332
    %422 = vmatpush1.bf16.msra.mxu0 %v331
    %423 = vmatprep.subr.bf16.mxu0 %v335
    %424 = vmatpush1.bf16.msra.mxu0 %v334
    %425 = vmatprep.subr.bf16.mxu0 %v338
    %426 = vmatpush1.bf16.msra.mxu0 %v337
    %427 = vmatprep.subr.bf16.mxu0 %v341
    %428 = vmatpush1.bf16.msra.mxu0 %v340
    %429 = vmatprep.subr.bf16.mxu0 %v344
    %430 = vmatpush1.bf16.msra.mxu0 %v343
    %431 = vmatprep.subr.bf16.mxu0 %v347
    %432 = vmatpush1.bf16.msra.mxu0 %v346
    %433 = vmatprep.subr.bf16.mxu0 %v350
    %434 = vmatpush1.bf16.msra.mxu0 %v349
    %435 = vmatprep.subr.bf16.mxu0 %v353
    %436 = vmatpush1.bf16.msra.mxu0 %v352
    %437 = vmatprep.subr.bf16.mxu0 %v356
    %438 = vmatpush1.bf16.msra.mxu0 %v355
    %439 = vmatprep.subr.bf16.mxu0 %v359
    %440 = vmatpush1.bf16.msra.mxu0 %v358
    %441 = vmatprep.mubr.bf16.mxu0 %v88
    %442 = vmatmul.mubr.bf16.gmra.mrb[0].mxu0 %v87
    %v443 = vpop.f32.mrb[0].mxu0
    %v444 = vadd.f32 0.0, %v443
    %v445 = vpop.f32.mrb[0].mxu0
    %v446 = vadd.f32 0.0, %v445
    %v447 = vpop.f32.mrb[0].mxu0
    %v448 = vadd.f32 0.0, %v447
    %v449 = vpop.f32.mrb[0].mxu0
    %v450 = vadd.f32 0.0, %v449
    %451 = vdwg.mxu0
    %452 = vmatprep.subr.bf16.mxu0 0
    %453 = vmatpush1.bf16.msra.mxu0 %v315
    %454 = vmatprep.subr.bf16.mxu0 0
    %455 = vmatpush1.bf16.msra.mxu0 %v318
    %456 = vmatprep.subr.bf16.mxu0 0
    %457 = vmatpush1.bf16.msra.mxu0 %v321
    %458 = vmatprep.subr.bf16.mxu0 0
    %459 = vmatpush1.bf16.msra.mxu0 %v324
    %460 = vmatprep.subr.bf16.mxu0 0
    %461 = vmatpush1.bf16.msra.mxu0 %v327
    %462 = vmatprep.subr.bf16.mxu0 0
    %463 = vmatpush1.bf16.msra.mxu0 %v330
    %464 = vmatprep.subr.bf16.mxu0 0
    %465 = vmatpush1.bf16.msra.mxu0 %v333
    %466 = vmatprep.subr.bf16.mxu0 0
    %467 = vmatpush1.bf16.msra.mxu0 %v336
    %468 = vmatprep.subr.bf16.mxu0 0
    %469 = vmatpush1.bf16.msra.mxu0 %v339
    %470 = vmatprep.subr.bf16.mxu0 0
    %471 = vmatpush1.bf16.msra.mxu0 %v342
    %472 = vmatprep.subr.bf16.mxu0 0
    %473 = vmatpush1.bf16.msra.mxu0 %v345
    %474 = vmatprep.subr.bf16.mxu0 0
    %475 = vmatpush1.bf16.msra.mxu0 %v348
    %476 = vmatprep.subr.bf16.mxu0 0
    %477 = vmatpush1.bf16.msra.mxu0 %v351
    %478 = vmatprep.subr.bf16.mxu0 0
    %479 = vmatpush1.bf16.msra.mxu0 %v354
    %480 = vmatprep.subr.bf16.mxu0 0
    %481 = vmatpush1.bf16.msra.mxu0 %v357
    %482 = vmatprep.subr.bf16.mxu0 0
    %483 = vmatpush1.bf16.msra.mxu0 %v360
    %484 = vmatprep.mubr.bf16.mxu0 %v88
    %485 = vmatmul.mubr.bf16.gmra.mrb[0].mxu0 %v87
    %v486 = vpop.f32.mrb[0].mxu0
    %v487 = vadd.f32 0.0, %v486
    %v488 = vpop.f32.mrb[0].mxu0
    %v489 = vpop.f32.mrb[0].mxu0
    %v490 = vadd.f32 0.0, %v489
    %v491 = vpop.f32.mrb[0].mxu0
    %492 = vdwg.mxu0
    %v493 = vpack.c.bf16 %v448, %v444
    %v494 = vpack.c.bf16 %v450, %v446
    %v495 = vpack.c.bf16 %v490, %v487
    %v499 = vunpack.c.l.b16 %v493
    %v500 = vunpack.c.l.b16 %v494
    %v501 = vunpack.c.l.b16 %v495
    %v502 = vunpack.c.h.b16 %v493
    %v503 = vunpack.c.h.b16 %v494
    %v504 = vunpack.c.h.b16 %v495
    %v505 = vpack.c.b16 %v500, %v499
    %v506 = vpack.c.b16 %v501, %v501
    %v507 = vpack.c.b16 %v503, %v502
    %v508 = vpack.c.b16 %v504, %v504
    %513 = vst [vmem:[#allocation7] sm:$0xff] %v505
    %514 = vst [vmem:[#allocation7 + $0x8] sm:$0xf] %v506
    %515 = vst [vmem:[#allocation7 + $0xc] sm:$0xff] %v507
    %516 = vst [vmem:[#allocation7 + $0x14] sm:$0xf] %v508
    // Predicated region
    $region22: #{tpu_custom_call.1} parent=1 // pred_check
      _
    $region23: #{tpu_custom_call.1} parent=1 // pred_check_branch
      %518 = sbr.rel (0) target = $region25
    $region24: #{tpu_custom_call.1} parent=1 // pred_region
      %s520 = ssub.s32 384, 384
      %521 = vsyncadd [#allocation4], %s520
      %s522 = sshll.u32 [#allocation7], 4
      %s523 = int_to_ptr.vmem [resolvable:$true] %s522
      %528 = dma.vmem_to_hbm [thread:$0]  %s523, 384, %s3, [#allocation4], 192, 192, 12
    $region25: #{tpu_custom_call.1} parent=1 // pred_fallthru
      _
    // Predicated region
    $region26: #{tpu_custom_call.1} parent=1 // pred_check
      _
    $region27: #{tpu_custom_call.1} parent=1 // pred_check_branch
      %530 = sbr.rel (0) target = $region29
    $region28: #{tpu_custom_call.1} parent=1 // pred_region
      %531 = dma.done [#allocation4], 384
    $region29: #{tpu_custom_call.1} parent=1 // pred_fallthru
      _
    %532 = vsyncpa [#allocation3], 1
    %533 = vsyncpa [#allocation6], 1
    %534 = vsyncpa [#allocation4], 1

</llo_original>
